<compile_context>
chip_gen: v7x
topology: tpu7x:2x2x1
jax: 0.10.0
libtpu: 0.0.40
codegen_flags: <defaults>
</compile_context>

<pallas_src>
import jax
import jax.numpy as jnp
from jax.experimental import pallas as pl
from jax.experimental.pallas import tpu as pltpu


def _round_up(v: int, m: int) -> int:
    return (v + m - 1) // m * m


def _make_kernel(H, W, K2, TN):
    def kernel(d_ref, yx_ref, o_ref):
        # d_ref : (K2, 2) int32  -- per-neighbor (dy, dx), constant block
        # yx_ref: (2, TN) int32  -- row 0 = y, row 1 = x for TN tokens
        # o_ref : (K2, TN) int32
        y = yx_ref[0:1, :]                      # (1, TN)
        x = yx_ref[1:2, :]                      # (1, TN)
        dy = d_ref[:, 0:1]                      # (K2, 1)
        dx = d_ref[:, 1:2]                      # (K2, 1)
        yy = jnp.clip(y + dy, 0, H - 1)         # (K2, TN)  broadcast add + clamp
        xx = jnp.clip(x + dx, 0, W - 1)         # (K2, TN)
        o_ref[...] = yy + xx                    # single lane-dense store
    return kernel


class Neighbor2D:
    """Pallas-TPU implementation of the PyTorch Neighbor2D module."""

    def __init__(self, H: int, W: int, n: int, dilated: int):
        self.H, self.W, self.n, self.dilated = H, W, n, dilated
        self.K1 = 2 * n + 1
        self.K2 = self.K1 * self.K1
        # Per-neighbor (dy, dx) offsets, k = iy*K1 + ix (matches torch flatten(0,1)).
        offs = [((iy - n) * dilated, (ix - n) * dilated)
                for iy in range(self.K1) for ix in range(self.K1)]
        self.doff = jnp.asarray(offs, jnp.int32)            # (K2, 2)

    def __call__(self, y, x, *, token_tile: int = 2048):
        assert y.shape == x.shape and y.ndim == 2
        B, L = y.shape
        N = B * L

        # Lane-dense token tile: multiple of 128, capped by token_tile.
        TN = _round_up(min(token_tile, _round_up(N, 128)), 128)
        Np = _round_up(N, TN)

        yx = jnp.stack([y.reshape(-1), x.reshape(-1)]).astype(jnp.int32)  # (2, N)
        if Np != N:
            yx = jnp.pad(yx, ((0, 0), (0, Np - N)))                       # (2, Np)

        kernel = _make_kernel(self.H, self.W, self.K2, TN)

        out = pl.pallas_call(
            kernel,
            out_shape=jax.ShapeDtypeStruct((self.K2, Np), jnp.int32),
            grid=(Np // TN,),
            in_specs=[
                pl.BlockSpec((self.K2, 2), lambda i: (0, 0)),   # neighbor offsets
                pl.BlockSpec((2, TN), lambda i: (0, i)),        # packed (y, x)
            ],
            out_specs=pl.BlockSpec((self.K2, TN), lambda i: (0, i)),
            compiler_params=pltpu.CompilerParams(
                dimension_semantics=("parallel",)),
            cost_estimate=pl.CostEstimate(
                flops=6 * self.K2 * Np,
                transcendentals=0,
                bytes_accessed=(2 + self.K2) * Np * 4 + self.K2 * 2 * 4),
        )(self.doff, yx)

        return out[:, :N].reshape(self.K2, B, L)

    # Pure-JAX reference mirroring the PyTorch forward exactly.
    def reference(self, y, x):
        d = jnp.arange(-self.n, self.n + 1, dtype=jnp.int32) * self.dilated
        xx = jnp.clip(x[None].astype(jnp.int32) + d[:, None, None], 0, self.W - 1)
        yy = jnp.clip(y[None].astype(jnp.int32) + d[:, None, None], 0, self.H - 1)
        return (yy[:, None] + xx[None]).reshape(self.K2, *y.shape)


if __name__ == "__main__":
    # Small deterministic example: 16x16 grid, 3x3 neighborhood, dilation 2.
    H, W, n, dilated = 16, 16, 1, 2
    B, L = 2, 8

    key = jax.random.PRNGKey(0)
    ky, kx = jax.random.split(key)
    y = jax.random.randint(ky, (B, L), 0, H, dtype=jnp.int32)
    x = jax.random.randint(kx, (B, L), 0, W, dtype=jnp.int32)

    module = Neighbor2D(H, W, n, dilated)
    out = jax.block_until_ready(module(y, x))

    ref = module.reference(y, x)
    assert out.shape == (module.K2, B, L)
    assert jnp.array_equal(out, ref), "mismatch vs reference"
    print("KERNEL_OK")
</pallas_src>

<mosaic_0001>
module attributes {stable_mosaic.version = 11 : i64} {
  func.func @kernel(%arg0: i32, %arg1: memref<9x2xi32, #tpu.memory_space<vmem>>, %arg2: memref<2x128xi32, #tpu.memory_space<vmem>>, %arg3: memref<9x128xi32, #tpu.memory_space<vmem>>) attributes {dimension_semantics = [#tpu.dimension_semantics<parallel>], iteration_bounds = array<i64: 1>, scalar_prefetch = 0 : i64, scratch_operands = 0 : i64, tpu.core_type = #tpu.core_type<tc>, window_params = [{pipeline_mode = #tpu.pipeline_mode<synchronous>, transform_indices = @transform_0, window_bounds = array<i64: 9, 2>}, {transform_indices = @transform_1, window_bounds = array<i64: 2, 128>}, {transform_indices = @transform_2, window_bounds = array<i64: 9, 128>}]} {
    %c0 = arith.constant 0 : index
    %c0_0 = arith.constant 0 : index
    %0 = vector.load %arg2[%c0, %c0_0] : memref<2x128xi32, #tpu.memory_space<vmem>>, vector<1x128xi32>
    %c1 = arith.constant 1 : index
    %c0_1 = arith.constant 0 : index
    %1 = vector.load %arg2[%c1, %c0_1] : memref<2x128xi32, #tpu.memory_space<vmem>>, vector<1x128xi32>
    %c0_2 = arith.constant 0 : index
    %c0_3 = arith.constant 0 : index
    %2 = vector.load %arg1[%c0_2, %c0_3] : memref<9x2xi32, #tpu.memory_space<vmem>>, vector<9x1xi32>
    %c0_4 = arith.constant 0 : index
    %c1_5 = arith.constant 1 : index
    %3 = vector.load %arg1[%c0_4, %c1_5] : memref<9x2xi32, #tpu.memory_space<vmem>>, vector<9x1xi32>
    %4 = vector.broadcast %0 : vector<1x128xi32> to vector<9x128xi32>
    %5 = vector.broadcast %2 : vector<9x1xi32> to vector<9x128xi32>
    %6 = arith.addi %4, %5 : vector<9x128xi32>
    %c0_i32 = arith.constant 0 : i32
    %c15_i32 = arith.constant 15 : i32
    %7 = vector.broadcast %c0_i32 : i32 to vector<9x128xi32>
    %8 = arith.maxsi %7, %6 : vector<9x128xi32>
    %9 = vector.broadcast %c15_i32 : i32 to vector<9x128xi32>
    %10 = arith.minsi %9, %8 : vector<9x128xi32>
    %11 = vector.broadcast %1 : vector<1x128xi32> to vector<9x128xi32>
    %12 = vector.broadcast %3 : vector<9x1xi32> to vector<9x128xi32>
    %13 = arith.addi %11, %12 : vector<9x128xi32>
    %c0_i32_6 = arith.constant 0 : i32
    %c15_i32_7 = arith.constant 15 : i32
    %14 = vector.broadcast %c0_i32_6 : i32 to vector<9x128xi32>
    %15 = arith.maxsi %14, %13 : vector<9x128xi32>
    %16 = vector.broadcast %c15_i32_7 : i32 to vector<9x128xi32>
    %17 = arith.minsi %16, %15 : vector<9x128xi32>
    %18 = arith.addi %10, %17 : vector<9x128xi32>
    %c0_8 = arith.constant 0 : index
    %c0_9 = arith.constant 0 : index
    %19 = vector.load %arg3[%c0_8, %c0_9] : memref<9x128xi32, #tpu.memory_space<vmem>>, vector<9x128xi32>
    tpu.vector_store %arg3[%c0_8, %c0_9], %18 {strides = array<i32>} : memref<9x128xi32, #tpu.memory_space<vmem>>, vector<9x128xi32>,
    return
  }
  func.func @transform_0(%arg0: i32) -> (i32, i32) {
    %c0_i32 = arith.constant 0 : i32
    %c0_i32_0 = arith.constant 0 : i32
    %c0_i32_1 = arith.constant 0 : i32
    return %c0_i32, %c0_i32_0 : i32, i32
  }
  func.func @transform_1(%arg0: i32) -> (i32, i32) {
    %c0_i32 = arith.constant 0 : i32
    %c0_i32_0 = arith.constant 0 : i32
    return %c0_i32, %arg0 : i32, i32
  }
  func.func @transform_2(%arg0: i32) -> (i32, i32) {
    %c0_i32 = arith.constant 0 : i32
    %c0_i32_0 = arith.constant 0 : i32
    return %c0_i32, %arg0 : i32, i32
  }
}

</mosaic_0001>

<llo_original>
// kernel: tpu_custom_call.1
$region0: #{tpu_custom_call.1}
  #allocation0 [shape = 'u32[]', space=smem, size = 0x4, offset = 0x4, fixed_abs, tag = 'smem constant byte address 0x4 - core index']
  #allocation1 [shape = 'u32[144,128]{1,0:T(1,128)}', space=vmem, size = 0x12000, scoped, tag = 'internal scratch']
  %s0 = inlined_call_operand.vmem [shape: s32[9,2], index: 0, kind: input, shape index: {}]
  %s1 = inlined_call_operand.vmem [shape: s32[2,128], index: 1, kind: input, shape index: {}]
  %s2 = inlined_call_operand.hbm [shape: s32[9,128], index: 2, kind: output, shape index: {}]
  %s3 = sld [smem:[#allocation0]]
  $region18: #{tpu_custom_call.1} parent=0
    _
  %s5 = ssub.s32 1, %s3
  %s6 = scalar_select 0, %s5, %s3
  $region1: #{tpu_custom_call.1} parent=0
    #allocation2 [shape = 'u8[8192]{0}', space=vmem, size = 0x2000, scoped, tag = 'output window, operand 0, single buffered']
    #allocation3 [shape = 's32[1]{0}', space=sflag, size = 0x4, scoped, tag = 'scoped memory for tpu_custom_call.1']
    %7 = vsyncpa [#allocation3], 0
    // Predicated region
    $region2: #{tpu_custom_call.1} parent=1 // pred_check
      _
    $region3: #{tpu_custom_call.1} parent=1 // pred_check_branch
      %9 = sbr.rel (0) target = $region5
    $region4: #{tpu_custom_call.1} parent=1 // pred_region
      _
    $region5: #{tpu_custom_call.1} parent=1 // pred_fallthru
      _
    // Predicated region
    $region6: #{tpu_custom_call.1} parent=1 // pred_check
      _
    $region7: #{tpu_custom_call.1} parent=1 // pred_check_branch
      %11 = sbr.rel (0) target = $region9
    $region8: #{tpu_custom_call.1} parent=1 // pred_region
      _
    $region9: #{tpu_custom_call.1} parent=1 // pred_fallthru
      _
    %v12 = vld [vmem:[%s1] sm:$0x1]
    %v13 = vld [vmem:[%s1 + $0x1] sm:$0x1]
    %v14 = vld [vmem:[%s0] sm:$0xff]
    %v15 = vld [vmem:[%s0 + $0x8] sm:$0x1]
    %v16 = vlaneseq
    %v17 = vshrl.u32 %v16, 7
    %v18 = vsub.s32 0, %v17
    %v19 = vrot.slane %v12, %v18
    %20 = vset.pattern.permute.xlu0 0
    %21 = vperm.xlu0 %20, %v14
    %v22 = vpop.permute.xlu0 %21
    %23 = vset.pattern.permute.xlu0 0
    %24 = vperm.xlu0 %23, %v15
    %v25 = vpop.permute.xlu0 %24
    %v26 = vadd.s32 %v19, %v22
    %v27 = vadd.s32 %v19, %v25
    %vm28 = vcmp.gt.s32.totalorder %v26, 0
    %v29 = vsel %vm28, %v26, 0
    %vm30 = vcmp.gt.s32.totalorder %v27, 0
    %v31 = vsel %vm30, %v27, 0
    %vm32 = vcmp.lt.s32.totalorder %v29, 15
    %v33 = vsel %vm32, %v29, 15
    %vm34 = vcmp.lt.s32.totalorder %v31, 15
    %v35 = vsel %vm34, %v31, 15
    %v36 = vlaneseq
    %v37 = vshrl.u32 %v36, 7
    %v38 = vsub.s32 0, %v37
    %v39 = vrot.slane %v13, %v38
    %40 = vset.pattern.permute.xlu0 1
    %41 = vperm.xlu0 %40, %v14
    %v42 = vpop.permute.xlu0 %41
    %43 = vset.pattern.permute.xlu0 1
    %44 = vperm.xlu0 %43, %v15
    %v45 = vpop.permute.xlu0 %44
    %v46 = vadd.s32 %v39, %v42
    %v47 = vadd.s32 %v39, %v45
    %vm48 = vcmp.gt.s32.totalorder %v46, 0
    %v49 = vsel %vm48, %v46, 0
    %vm50 = vcmp.gt.s32.totalorder %v47, 0
    %v51 = vsel %vm50, %v47, 0
    %vm52 = vcmp.lt.s32.totalorder %v49, 15
    %v53 = vsel %vm52, %v49, 15
    %vm54 = vcmp.lt.s32.totalorder %v51, 15
    %v55 = vsel %vm54, %v51, 15
    %v56 = vadd.s32 %v33, %v53
    %v57 = vadd.s32 %v35, %v55
    %58 = vst [vmem:[#allocation2] sm:$0xff] %v56
    %59 = vst [vmem:[#allocation2 + $0x8] sm:$0x1] %v57
    // Predicated region
    $region10: #{tpu_custom_call.1} parent=1 // pred_check
      _
    $region11: #{tpu_custom_call.1} parent=1 // pred_check_branch
      %61 = sbr.rel (0) target = $region13
    $region12: #{tpu_custom_call.1} parent=1 // pred_region
      %s63 = ssub.s32 256, 256
      %64 = vsyncadd [#allocation3], %s63
      %s65 = sshll.u32 [#allocation2], 4
      %s66 = int_to_ptr.vmem [resolvable:$true] %s65
      %71 = dma.vmem_to_hbm [thread:$0]  %s66, 256, %s2, [#allocation3], 128, 128, 8
    $region13: #{tpu_custom_call.1} parent=1 // pred_fallthru
      _
    // Predicated region
    $region14: #{tpu_custom_call.1} parent=1 // pred_check
      _
    $region15: #{tpu_custom_call.1} parent=1 // pred_check_branch
      %73 = sbr.rel (0) target = $region17
    $region16: #{tpu_custom_call.1} parent=1 // pred_region
      %74 = dma.done [#allocation3], 256
    $region17: #{tpu_custom_call.1} parent=1 // pred_fallthru
      _
    %75 = vsyncpa [#allocation3], 1

</llo_original>
